<compile_context>
chip_gen: v6e
topology: v6e:2x2x1
jax: 0.10.0
libtpu: 0.0.40
codegen_flags: <defaults>
</compile_context>

<pallas_src>
import functools

import jax
import jax.numpy as jnp
from jax import lax
from jax.experimental import pallas as pl
from jax.experimental.pallas import tpu as pltpu


def _rmsnorm_kernel(x_ref, g_ref, o_ref, *, epsilon, inv_d):
    x = x_ref[...].astype(jnp.float32)                    # (tr, d_pad)
    g = g_ref[...].astype(jnp.float32)                    # (1,  d_pad)
    # Mean of squares over the TRUE d_model (padding lanes are zero).
    ms = jnp.sum(x * x, axis=-1, keepdims=True) * inv_d   # (tr, 1)
    inv = lax.rsqrt(ms + epsilon)                         # EUP rsqrt per row
    o_ref[...] = (x * inv * g).astype(o_ref.dtype)


def _round_up(n, m):
    return ((n + m - 1) // m) * m


def rmsnorm(x, gain, epsilon=1e-5, tile_budget_bytes=4 * 1024 * 1024):
    """x: (..., d_model), gain: broadcastable over the last dim (d_model,)."""
    d_model = x.shape[-1]
    lead = x.shape[:-1]
    rows = 1
    for s in lead:
        rows *= s

    x2d = x.reshape(rows, d_model)
    g2d = jnp.asarray(gain).reshape(1, d_model)

    # Lane-dense last dim: pad d_model to a multiple of 128.
    d_pad = _round_up(d_model, 128)
    if d_pad != d_model:
        x2d = jnp.pad(x2d, ((0, 0), (0, d_pad - d_model)))
        g2d = jnp.pad(g2d, ((0, 0), (0, d_pad - d_model)))

    # VMEM-budgeted row tile (f32 working precision), multiple of 8, 8..2048.
    tr = tile_budget_bytes // (d_pad * 4)
    tr = max(8, min(2048, (tr // 8) * 8))
    tr = min(tr, _round_up(rows, 8))
    tr = max(8, (tr // 8) * 8)

    # Pad rows to a multiple of the tile (keeps double-buffering alive for
    # arbitrary batch*seq; padded rows normalize zeros -> finite, sliced off).
    rows_pad = _round_up(rows, tr)
    if rows_pad != rows:
        x2d = jnp.pad(x2d, ((0, rows_pad - rows), (0, 0)))

    grid = (rows_pad // tr,)
    kernel = functools.partial(
        _rmsnorm_kernel, epsilon=float(epsilon), inv_d=1.0 / float(d_model)
    )

    out2d = pl.pallas_call(
        kernel,
        out_shape=jax.ShapeDtypeStruct((rows_pad, d_pad), x.dtype),
        grid_spec=pltpu.PrefetchScalarGridSpec(
            num_scalar_prefetch=0,
            grid=grid,
            in_specs=[
                pl.BlockSpec((tr, d_pad), lambda i: (i, 0)),
                pl.BlockSpec((1, d_pad), lambda i: (0, 0)),  # gain stays resident
            ],
            out_specs=pl.BlockSpec((tr, d_pad), lambda i: (i, 0)),
        ),
        compiler_params=pltpu.CompilerParams(
            dimension_semantics=("parallel",),
            vmem_limit_bytes=48 * 1024 * 1024,
        ),
    )(x2d, g2d)

    out2d = out2d[:rows, :d_model]
    return out2d.reshape(*lead, d_model)


if __name__ == "__main__":
    key = jax.random.PRNGKey(0)
    kx, kg = jax.random.split(key)

    batch, seq, d_model = 2, 8, 32
    x = jax.random.normal(kx, (batch, seq, d_model), dtype=jnp.float32)
    # deterministic "parameter": gain initialized like ones + small noise
    gain = jnp.ones((d_model,), jnp.float32) + 0.01 * jax.random.normal(
        kg, (d_model,), dtype=jnp.float32
    )

    out = rmsnorm(x, gain, epsilon=1e-5)
    out = jax.block_until_ready(out)

    # reference check in plain JAX (matches the torch module semantics)
    rms = jnp.sqrt(jnp.mean(x * x, axis=-1, keepdims=True) + 1e-5)
    ref = (x / rms) * gain
    assert out.shape == x.shape
    assert jnp.allclose(out, ref, atol=1e-5, rtol=1e-5)

    print("KERNEL_OK")
</pallas_src>

<mosaic_0001>
module attributes {stable_mosaic.version = 11 : i64} {
  func.func @_rmsnorm_kernel(%arg0: i32, %arg1: memref<16x128xf32, #tpu.memory_space<vmem>>, %arg2: memref<1x128xf32, #tpu.memory_space<vmem>>, %arg3: memref<16x128xf32, #tpu.memory_space<vmem>>) attributes {dimension_semantics = [#tpu.dimension_semantics<parallel>], iteration_bounds = array<i64: 1>, scalar_prefetch = 0 : i64, scratch_operands = 0 : i64, tpu.core_type = #tpu.core_type<tc>, window_params = [{transform_indices = @transform_0, window_bounds = array<i64: 16, 128>}, {pipeline_mode = #tpu.pipeline_mode<synchronous>, transform_indices = @transform_1, window_bounds = array<i64: 1, 128>}, {transform_indices = @transform_2, window_bounds = array<i64: 16, 128>}]} {
    %c0 = arith.constant 0 : index
    %c0_0 = arith.constant 0 : index
    %0 = vector.load %arg1[%c0, %c0_0] : memref<16x128xf32, #tpu.memory_space<vmem>>, vector<16x128xf32>
    %c0_1 = arith.constant 0 : index
    %c0_2 = arith.constant 0 : index
    %1 = vector.load %arg2[%c0_1, %c0_2] : memref<1x128xf32, #tpu.memory_space<vmem>>, vector<1x128xf32>
    %2 = arith.mulf %0, %0 : vector<16x128xf32>
    %cst = arith.constant dense<0.000000e+00> : vector<16xf32>
    %3 = vector.multi_reduction <add>, %2, %cst [1] : vector<16x128xf32> to vector<16xf32>
    %4 = vector.shape_cast %3 : vector<16xf32> to vector<16x1xf32>
    %cst_3 = arith.constant 3.125000e-02 : f32
    %5 = vector.broadcast %cst_3 : f32 to vector<16x1xf32>
    %6 = arith.mulf %4, %5 : vector<16x1xf32>
    %cst_4 = arith.constant 9.99999974E-6 : f32
    %7 = vector.broadcast %cst_4 : f32 to vector<16x1xf32>
    %8 = arith.addf %6, %7 : vector<16x1xf32>
    %9 = math.rsqrt %8 : vector<16x1xf32>
    %10 = vector.broadcast %9 : vector<16x1xf32> to vector<16x128xf32>
    %11 = arith.mulf %0, %10 : vector<16x128xf32>
    %12 = vector.broadcast %1 : vector<1x128xf32> to vector<16x128xf32>
    %13 = arith.mulf %11, %12 : vector<16x128xf32>
    %c0_5 = arith.constant 0 : index
    %c0_6 = arith.constant 0 : index
    %14 = vector.load %arg3[%c0_5, %c0_6] : memref<16x128xf32, #tpu.memory_space<vmem>>, vector<16x128xf32>
    tpu.vector_store %arg3[%c0_5, %c0_6], %13 {strides = array<i32>} : memref<16x128xf32, #tpu.memory_space<vmem>>, vector<16x128xf32>,
    return
  }
  func.func @transform_0(%arg0: i32) -> (i32, i32) {
    %c0_i32 = arith.constant 0 : i32
    %c0_i32_0 = arith.constant 0 : i32
    return %arg0, %c0_i32 : i32, i32
  }
  func.func @transform_1(%arg0: i32) -> (i32, i32) {
    %c0_i32 = arith.constant 0 : i32
    %c0_i32_0 = arith.constant 0 : i32
    %c0_i32_1 = arith.constant 0 : i32
    return %c0_i32, %c0_i32_0 : i32, i32
  }
  func.func @transform_2(%arg0: i32) -> (i32, i32) {
    %c0_i32 = arith.constant 0 : i32
    %c0_i32_0 = arith.constant 0 : i32
    return %arg0, %c0_i32 : i32, i32
  }
}

</mosaic_0001>

<llo_original>
// kernel: tpu_custom_call.1
$region0: #{tpu_custom_call.1}
  #allocation0 [shape = 'u32[]', space=smem, size = 0x4, offset = 0x4, fixed_abs, tag = 'smem constant byte address 0x4 - core index']
  #allocation1 [shape = 'u32[144,128]{1,0:T(1,128)}', space=vmem, size = 0x12000, scoped, tag = 'internal scratch']
  %s0 = inlined_call_operand.hbm [shape: f32[16,128], index: 0, kind: input, shape index: {}]
  %s1 = inlined_call_operand.vmem [shape: f32[1,128], index: 1, kind: input, shape index: {}]
  %s2 = inlined_call_operand.hbm [shape: f32[16,128], index: 2, kind: output, shape index: {}]
  %s3 = sld [smem:[#allocation0]]
  $region22: #{tpu_custom_call.1} parent=0
    _
  %s5 = ssub.s32 1, %s3
  %s6 = scalar_select 0, %s5, %s3
  $region1: #{tpu_custom_call.1} parent=0
    #allocation2 [shape = 'u8[8192]{0}', space=vmem, size = 0x2000, scoped, tag = 'input window, operand 0, single buffered']
    #allocation3 [shape = 's32[1]{0}', space=sflag, size = 0x4, scoped, tag = 'scoped memory for tpu_custom_call.1']
    #allocation4 [shape = 's32[1]{0}', space=sflag, size = 0x4, scoped, tag = 'scoped memory for tpu_custom_call.1']
    #allocation5 [shape = 'u8[8192]{0}', space=vmem, size = 0x2000, scoped, tag = 'output window, operand 0, single buffered']
    %7 = vsyncpa [#allocation3], 0
    %8 = vsyncpa [#allocation4], 0
    // Predicated region
    $region2: #{tpu_custom_call.1} parent=1 // pred_check
      _
    $region3: #{tpu_custom_call.1} parent=1 // pred_check_branch
      %10 = sbr.rel (0) target = $region5
    $region4: #{tpu_custom_call.1} parent=1 // pred_region
      %s12 = ssub.s32 256, 256
      %13 = vsyncadd [#allocation3], %s12
      %s14 = sshll.u32 [#allocation2], 4
      %s15 = int_to_ptr.vmem [resolvable:$true] %s14
      %20 = dma.hbm_to_vmem [thread:$0]  %s0, 256, %s15, [#allocation3], 128, 128, 8
    $region5: #{tpu_custom_call.1} parent=1 // pred_fallthru
      _
    // Predicated region
    $region6: #{tpu_custom_call.1} parent=1 // pred_check
      _
    $region7: #{tpu_custom_call.1} parent=1 // pred_check_branch
      %22 = sbr.rel (0) target = $region9
    $region8: #{tpu_custom_call.1} parent=1 // pred_region
      _
    $region9: #{tpu_custom_call.1} parent=1 // pred_fallthru
      _
    // Predicated region
    $region10: #{tpu_custom_call.1} parent=1 // pred_check
      _
    $region11: #{tpu_custom_call.1} parent=1 // pred_check_branch
      %24 = sbr.rel (0) target = $region13
    $region12: #{tpu_custom_call.1} parent=1 // pred_region
      %25 = dma.done [#allocation3], 256
    $region13: #{tpu_custom_call.1} parent=1 // pred_fallthru
      _
    %v26 = vld [vmem:[#allocation2] sm:$0xff]
    %v27 = vld [vmem:[#allocation2 + $0x8] sm:$0xff]
    %v28 = vld [vmem:[%s1] sm:$0x1]
    %v29 = vmul.f32 %v26, %v26
    %v30 = vmul.f32 %v27, %v27
    %31 = vadd.xlane.f32.xlu0 %v29
    %v32 = vpop.xlane.xlu0 %31
    %33 = vadd.xlane.f32.xlu0 %v30
    %v34 = vpop.xlane.xlu0 %33
    %v35 = vmul.f32 %v32, 0.03125
    %v36 = vmul.f32 %v34, 0.03125
    %v37 = vadd.f32 %v35, 1e-05
    %v38 = vadd.f32 %v36, 1e-05
    %v39 = vrsqrt.pop %v37
    %v40 = vrsqrt.pop %v38
    %v41 = vmul.f32 %v26, %v39
    %v42 = vmul.f32 %v27, %v40
    %v44 = vlaneseq
    %v45 = vshrl.u32 %v44, 7
    %v46 = vsub.s32 0, %v45
    %v47 = vrot.slane %v28, %v46
    %v49 = vmul.f32 %v41, %v47
    %v50 = vmul.f32 %v42, %v47
    %51 = vst [vmem:[#allocation5] sm:$0xff] %v49
    %52 = vst [vmem:[#allocation5 + $0x8] sm:$0xff] %v50
    // Predicated region
    $region14: #{tpu_custom_call.1} parent=1 // pred_check
      _
    $region15: #{tpu_custom_call.1} parent=1 // pred_check_branch
      %54 = sbr.rel (0) target = $region17
    $region16: #{tpu_custom_call.1} parent=1 // pred_region
      %s56 = ssub.s32 256, 256
      %57 = vsyncadd [#allocation4], %s56
      %s58 = sshll.u32 [#allocation5], 4
      %s59 = int_to_ptr.vmem [resolvable:$true] %s58
      %64 = dma.vmem_to_hbm [thread:$0]  %s59, 256, %s2, [#allocation4], 128, 128, 8
    $region17: #{tpu_custom_call.1} parent=1 // pred_fallthru
      _
    // Predicated region
    $region18: #{tpu_custom_call.1} parent=1 // pred_check
      _
    $region19: #{tpu_custom_call.1} parent=1 // pred_check_branch
      %66 = sbr.rel (0) target = $region21
    $region20: #{tpu_custom_call.1} parent=1 // pred_region
      %67 = dma.done [#allocation4], 256
    $region21: #{tpu_custom_call.1} parent=1 // pred_fallthru
      _
    %68 = vsyncpa [#allocation3], 1
    %69 = vsyncpa [#allocation4], 1

</llo_original>
